<compile_context>
chip_gen: v6e
topology: v6e:2x2x1
jax: 0.10.0
libtpu: 0.0.40
codegen_flags: <defaults>
</compile_context>

<pallas_src>
import functools

import jax
import jax.numpy as jnp
from jax.experimental import pallas as pl
from jax.experimental.pallas import tpu as pltpu


# ----------------------------- helpers ---------------------------------------


def _round_up(x, m):
    return ((x + m - 1) // m) * m


def _device_kind():
    try:
        return jax.devices()[0].device_kind.lower()
    except Exception:
        return ""


def _has_bf16_vpu(kind):
    # v6e / v7x have a bf16 VPU path; v5e and older do not.
    return ("v6" in kind) or ("v7" in kind)


def _is_two_tensorcore(kind):
    # v7x has 2 TensorCores per chip; keep >=2 grid steps so both get work.
    return "v7" in kind


def _vmem_bytes_estimate(tb, dims, n_actions):
    """Rough per-call VMEM footprint for tile size `tb` (double buffers included)."""
    obs = dims[0]
    hmax = max(dims)
    b = 2 * tb * obs * 4 + 2 * tb * n_actions * 4          # x / out tiles (f32, 2 bufs)
    b += 2 * sum(dims[i] * dims[i + 1] * 2 + dims[i + 1] * 4
                 for i in range(len(dims) - 1))            # bf16 W + f32 b (2 bufs)
    b += 3 * tb * hmax * 4                                  # live f32/bf16 intermediates
    return b


def _choose_tile(batch, dims, n_actions, tb_cap, two_tc, vmem_budget=12 << 20):
    b16 = _round_up(max(batch, 1), 16)
    tb = min(_round_up(tb_cap, 16), b16)
    # Keep comfortably inside scoped VMEM (smallest is v7x: 64 MiB total / 32 MiB scoped).
    while tb > 16 and _vmem_bytes_estimate(tb, dims, n_actions) > vmem_budget:
        tb = max(16, _round_up(tb // 2, 16))
    # On v7x, avoid collapsing to grid=(1,): split into >=2 tiles so both TCs are used.
    if two_tc and b16 > 16 and b16 <= tb:
        tb = max(16, _round_up((b16 + 1) // 2, 16))
    return tb


# ----------------------------- kernel -----------------------------------------


def _mlp_kernel(n_linear, bf16_elementwise, *refs):
    # refs = (x_ref, w0, b0, w1, b1, ..., w_{L-1}, b_{L-1}, out_ref)
    x_ref = refs[0]
    out_ref = refs[-1]
    p = refs[1:-1]

    # f32 -> bf16 cast happens on the VPU, hidden under the BlockSpec pipeline.
    h = x_ref[...].astype(jnp.bfloat16)                       # bf16 (TB, obs_dim)
    for i in range(n_linear):
        w = p[2 * i][...]                                      # bf16 (in, out), resident
        b = p[2 * i + 1][...]                                  # f32  (1, out)
        acc = jnp.dot(h, w, preferred_element_type=jnp.float32) + b   # MXU, f32 acc
        if i < n_linear - 1:
            if bf16_elementwise:
                # v6e/v7x: bf16 VPU path halves VALU work for the elementwise chain.
                hb = acc.astype(jnp.bfloat16)
                h = jnp.maximum(hb, hb * jnp.bfloat16(0.01))   # LeakyReLU(0.01), bf16
            else:
                # v5e and older: no bf16 VPU; keep the chain in f32.
                acc = jnp.maximum(acc, 0.01 * acc)             # LeakyReLU(0.01), f32
                h = acc.astype(jnp.bfloat16)
        else:
            out_ref[...] = acc.astype(out_ref.dtype)


# ----------------------------- wrapper -----------------------------------------


def prepare_params(params):
    """One-time conversion: bf16 weights (MXU inputs), f32 biases. Do NOT redo per call."""
    return [(w.astype(jnp.bfloat16), b.astype(jnp.float32)) for w, b in params]


def dqn_vector_feature_forward(x, params, *, tb=2048):
    """x: [B, obs_dim] float32.  params: list of (W_t, b) with W_t (in, out), b (1, out).

    Pass params through `prepare_params` once (bf16 W / f32 b); f32 params are accepted
    and cast at trace time, but that re-casting costs an extra HBM pass per call.
    """
    n_linear = len(params)
    obs_dim = params[0][0].shape[0]
    n_actions = params[-1][0].shape[1]
    dims = [obs_dim] + [w.shape[1] for w, _ in params]
    batch = x.shape[0]

    kind = _device_kind()
    bf16_elementwise = _has_bf16_vpu(kind)
    two_tc = _is_two_tensorcore(kind)

    tb_eff = _choose_tile(batch, dims, n_actions, tb, two_tc)
    b_pad = _round_up(batch, tb_eff)

    x_in = x if x.dtype == jnp.float32 else x.astype(jnp.float32)
    if b_pad != batch:
        x_in = jnp.pad(x_in, ((0, b_pad - batch), (0, 0)))

    flat_params = []
    in_specs = [pl.BlockSpec((tb_eff, obs_dim), lambda i: (i, 0))]
    for w, b in params:
        w_bf16 = w if w.dtype == jnp.bfloat16 else w.astype(jnp.bfloat16)
        b_f32 = b if b.dtype == jnp.float32 else b.astype(jnp.float32)
        flat_params.append(w_bf16)
        flat_params.append(b_f32)
        # Constant index_map -> DMA'd once, VMEM-resident across all batch tiles.
        in_specs.append(pl.BlockSpec(w.shape, lambda i: (0, 0)))
        in_specs.append(pl.BlockSpec(b.shape, lambda i: (0, 0)))

    out_spec = pl.BlockSpec((tb_eff, n_actions), lambda i: (i, 0))

    flops = 2 * b_pad * sum(w.shape[0] * w.shape[1] for w, _ in params)
    bytes_accessed = (
        b_pad * obs_dim * 4                                        # f32 input
        + sum(w.size * 2 + bb.size * 4 for w, bb in params)        # bf16 W + f32 b
        + b_pad * n_actions * 4                                    # f32 output
    )

    kernel = functools.partial(_mlp_kernel, n_linear, bf16_elementwise)

    out = pl.pallas_call(
        kernel,
        out_shape=jax.ShapeDtypeStruct((b_pad, n_actions), jnp.float32),
        grid=(b_pad // tb_eff,),
        in_specs=in_specs,
        out_specs=out_spec,
        compiler_params=pltpu.CompilerParams(
            dimension_semantics=("parallel",),  # shard batch tiles across v7x's 2 TCs
        ),
        cost_estimate=pl.CostEstimate(
            flops=flops, transcendentals=0, bytes_accessed=bytes_accessed
        ),
    )(x_in, *flat_params)

    return out[:batch]


# ----------------------------- reference / test --------------------------------


def init_params(key, obs_dim, n_actions, num_hidden_layers, size_hidden_layers):
    """Deterministic synthetic init matching the nn.Sequential layer shapes."""
    dims = [obs_dim] + [size_hidden_layers] * (num_hidden_layers - 1) + [n_actions]
    params = []
    for i in range(len(dims) - 1):
        key, kw, kb = jax.random.split(key, 3)
        fan_in, fan_out = dims[i], dims[i + 1]
        bound = 1.0 / jnp.sqrt(jnp.float32(fan_in))
        # PyTorch Linear stores W as (out, in); we store the transpose (in, out).
        w_t = jax.random.uniform(kw, (fan_in, fan_out), jnp.float32, -bound, bound)
        b = jax.random.uniform(kb, (1, fan_out), jnp.float32, -bound, bound)
        params.append((w_t, b))
    return params


def reference_forward(x, params, bf16_elementwise):
    """JAX reference mirroring the kernel's bf16-MXU / f32-accumulate numerics.

    Note: deviates from pure-f32 PyTorch by <~1e-2 relative (bf16 weights/activations).
    """
    h = x.astype(jnp.bfloat16)
    for i, (w, b) in enumerate(params):
        acc = jnp.dot(h, w.astype(jnp.bfloat16),
                      preferred_element_type=jnp.float32) + b.astype(jnp.float32)
        if i < len(params) - 1:
            if bf16_elementwise:
                hb = acc.astype(jnp.bfloat16)
                h = jnp.maximum(hb, hb * jnp.bfloat16(0.01))
            else:
                acc = jnp.maximum(acc, 0.01 * acc)
                h = acc.astype(jnp.bfloat16)
        else:
            return acc
    return None


if __name__ == "__main__":
    # Small shapes consistent with the module: vector observation -> Q values.
    batch = 50                 # ragged on purpose: exercises padding
    obs_dim = 32               # obs_shape = (32,)
    n_actions = 8
    num_hidden_layers = 3
    size_hidden_layers = 128

    key = jax.random.PRNGKey(0)
    key, kx = jax.random.split(key)
    x = jax.random.normal(kx, (batch, obs_dim), jnp.float32)

    params_f32 = init_params(key, obs_dim, n_actions, num_hidden_layers,
                             size_hidden_layers)
    params = prepare_params(params_f32)    # one-time bf16/f32 conversion

    q = dqn_vector_feature_forward(x, params)
    q = jax.block_until_ready(q)

    bf16_elementwise = _has_bf16_vpu(_device_kind())
    q_ref = reference_forward(x, params_f32, bf16_elementwise)
    assert q.shape == (batch, n_actions)
    assert jnp.allclose(q, q_ref, atol=2e-2, rtol=2e-2), "mismatch vs JAX reference"

    print("KERNEL_OK")
</pallas_src>

<mosaic_0001>
module attributes {stable_mosaic.version = 11 : i64} {
  func.func @_mlp_kernel(%arg0: i32, %arg1: memref<64x32xf32, #tpu.memory_space<vmem>>, %arg2: memref<32x128xbf16, #tpu.memory_space<vmem>>, %arg3: memref<1x128xf32, #tpu.memory_space<vmem>>, %arg4: memref<128x128xbf16, #tpu.memory_space<vmem>>, %arg5: memref<1x128xf32, #tpu.memory_space<vmem>>, %arg6: memref<128x8xbf16, #tpu.memory_space<vmem>>, %arg7: memref<1x8xf32, #tpu.memory_space<vmem>>, %arg8: memref<64x8xf32, #tpu.memory_space<vmem>>) attributes {dimension_semantics = [#tpu.dimension_semantics<parallel>], iteration_bounds = array<i64: 1>, scalar_prefetch = 0 : i64, scratch_operands = 0 : i64, tpu.core_type = #tpu.core_type<tc>, window_params = [{transform_indices = @transform_0, window_bounds = array<i64: 64, 32>}, {pipeline_mode = #tpu.pipeline_mode<synchronous>, transform_indices = @transform_1, window_bounds = array<i64: 32, 128>}, {pipeline_mode = #tpu.pipeline_mode<synchronous>, transform_indices = @transform_2, window_bounds = array<i64: 1, 128>}, {pipeline_mode = #tpu.pipeline_mode<synchronous>, transform_indices = @transform_3, window_bounds = array<i64: 128, 128>}, {pipeline_mode = #tpu.pipeline_mode<synchronous>, transform_indices = @transform_4, window_bounds = array<i64: 1, 128>}, {pipeline_mode = #tpu.pipeline_mode<synchronous>, transform_indices = @transform_5, window_bounds = array<i64: 128, 8>}, {pipeline_mode = #tpu.pipeline_mode<synchronous>, transform_indices = @transform_6, window_bounds = array<i64: 1, 8>}, {transform_indices = @transform_7, window_bounds = array<i64: 64, 8>}]} {
    %c0 = arith.constant 0 : index
    %c0_0 = arith.constant 0 : index
    %0 = vector.load %arg1[%c0, %c0_0] : memref<64x32xf32, #tpu.memory_space<vmem>>, vector<64x32xf32>
    %1 = arith.truncf %0 : vector<64x32xf32> to vector<64x32xbf16>
    %c0_1 = arith.constant 0 : index
    %c0_2 = arith.constant 0 : index
    %2 = vector.load %arg2[%c0_1, %c0_2] : memref<32x128xbf16, #tpu.memory_space<vmem>>, vector<32x128xbf16>
    %c0_3 = arith.constant 0 : index
    %c0_4 = arith.constant 0 : index
    %3 = vector.load %arg3[%c0_3, %c0_4] : memref<1x128xf32, #tpu.memory_space<vmem>>, vector<1x128xf32>
    %cst = arith.constant dense<0.000000e+00> : vector<64x128xf32>
    %4 = tpu.matmul %1, %2, %cst {dimension_numbers = #tpu.dot_dimension_numbers<[1], [0], [0], [1], [0, 0, 1, 1], [], []>} : vector<64x32xbf16>, vector<32x128xbf16>, vector<64x128xf32> -> vector<64x128xf32>
    %5 = vector.broadcast %3 : vector<1x128xf32> to vector<64x128xf32>
    %6 = arith.addf %4, %5 : vector<64x128xf32>
    %cst_5 = arith.constant 0.00999999977 : f32
    %7 = vector.broadcast %cst_5 : f32 to vector<64x128xf32>
    %8 = arith.mulf %7, %6 : vector<64x128xf32>
    %9 = arith.maximumf %6, %8 : vector<64x128xf32>
    %10 = arith.truncf %9 : vector<64x128xf32> to vector<64x128xbf16>
    %c0_6 = arith.constant 0 : index
    %c0_7 = arith.constant 0 : index
    %11 = vector.load %arg4[%c0_6, %c0_7] : memref<128x128xbf16, #tpu.memory_space<vmem>>, vector<128x128xbf16>
    %c0_8 = arith.constant 0 : index
    %c0_9 = arith.constant 0 : index
    %12 = vector.load %arg5[%c0_8, %c0_9] : memref<1x128xf32, #tpu.memory_space<vmem>>, vector<1x128xf32>
    %cst_10 = arith.constant dense<0.000000e+00> : vector<64x128xf32>
    %13 = tpu.matmul %10, %11, %cst_10 {dimension_numbers = #tpu.dot_dimension_numbers<[1], [0], [0], [1], [0, 0, 1, 1], [], []>} : vector<64x128xbf16>, vector<128x128xbf16>, vector<64x128xf32> -> vector<64x128xf32>
    %14 = vector.broadcast %12 : vector<1x128xf32> to vector<64x128xf32>
    %15 = arith.addf %13, %14 : vector<64x128xf32>
    %cst_11 = arith.constant 0.00999999977 : f32
    %16 = vector.broadcast %cst_11 : f32 to vector<64x128xf32>
    %17 = arith.mulf %16, %15 : vector<64x128xf32>
    %18 = arith.maximumf %15, %17 : vector<64x128xf32>
    %19 = arith.truncf %18 : vector<64x128xf32> to vector<64x128xbf16>
    %c0_12 = arith.constant 0 : index
    %c0_13 = arith.constant 0 : index
    %20 = vector.load %arg6[%c0_12, %c0_13] : memref<128x8xbf16, #tpu.memory_space<vmem>>, vector<128x8xbf16>
    %c0_14 = arith.constant 0 : index
    %c0_15 = arith.constant 0 : index
    %21 = vector.load %arg7[%c0_14, %c0_15] : memref<1x8xf32, #tpu.memory_space<vmem>>, vector<1x8xf32>
    %cst_16 = arith.constant dense<0.000000e+00> : vector<64x8xf32>
    %22 = tpu.matmul %19, %20, %cst_16 {dimension_numbers = #tpu.dot_dimension_numbers<[1], [0], [0], [1], [0, 0, 1, 1], [], []>} : vector<64x128xbf16>, vector<128x8xbf16>, vector<64x8xf32> -> vector<64x8xf32>
    %23 = vector.broadcast %21 : vector<1x8xf32> to vector<64x8xf32>
    %24 = arith.addf %22, %23 : vector<64x8xf32>
    %c0_17 = arith.constant 0 : index
    %c0_18 = arith.constant 0 : index
    %25 = vector.load %arg8[%c0_17, %c0_18] : memref<64x8xf32, #tpu.memory_space<vmem>>, vector<64x8xf32>
    tpu.vector_store %arg8[%c0_17, %c0_18], %24 {strides = array<i32>} : memref<64x8xf32, #tpu.memory_space<vmem>>, vector<64x8xf32>,
    return
  }
  func.func @transform_0(%arg0: i32) -> (i32, i32) {
    %c0_i32 = arith.constant 0 : i32
    %c0_i32_0 = arith.constant 0 : i32
    return %arg0, %c0_i32 : i32, i32
  }
  func.func @transform_1(%arg0: i32) -> (i32, i32) {
    %c0_i32 = arith.constant 0 : i32
    %c0_i32_0 = arith.constant 0 : i32
    %c0_i32_1 = arith.constant 0 : i32
    return %c0_i32, %c0_i32_0 : i32, i32
  }
  func.func @transform_2(%arg0: i32) -> (i32, i32) {
    %c0_i32 = arith.constant 0 : i32
    %c0_i32_0 = arith.constant 0 : i32
    %c0_i32_1 = arith.constant 0 : i32
    return %c0_i32, %c0_i32_0 : i32, i32
  }
  func.func @transform_3(%arg0: i32) -> (i32, i32) {
    %c0_i32 = arith.constant 0 : i32
    %c0_i32_0 = arith.constant 0 : i32
    %c0_i32_1 = arith.constant 0 : i32
    return %c0_i32, %c0_i32_0 : i32, i32
  }
  func.func @transform_4(%arg0: i32) -> (i32, i32) {
    %c0_i32 = arith.constant 0 : i32
    %c0_i32_0 = arith.constant 0 : i32
    %c0_i32_1 = arith.constant 0 : i32
    return %c0_i32, %c0_i32_0 : i32, i32
  }
  func.func @transform_5(%arg0: i32) -> (i32, i32) {
    %c0_i32 = arith.constant 0 : i32
    %c0_i32_0 = arith.constant 0 : i32
    %c0_i32_1 = arith.constant 0 : i32
    return %c0_i32, %c0_i32_0 : i32, i32
  }
  func.func @transform_6(%arg0: i32) -> (i32, i32) {
    %c0_i32 = arith.constant 0 : i32
    %c0_i32_0 = arith.constant 0 : i32
    %c0_i32_1 = arith.constant 0 : i32
    return %c0_i32, %c0_i32_0 : i32, i32
  }
  func.func @transform_7(%arg0: i32) -> (i32, i32) {
    %c0_i32 = arith.constant 0 : i32
    %c0_i32_0 = arith.constant 0 : i32
    return %arg0, %c0_i32 : i32, i32
  }
}

</mosaic_0001>

<llo_original>
// kernel: tpu_custom_call.1
$region0: #{tpu_custom_call.1}
  #allocation0 [shape = 'u32[]', space=smem, size = 0x4, offset = 0x4, fixed_abs, tag = 'smem constant byte address 0x4 - core index']
  #allocation1 [shape = 'u32[144,128]{1,0:T(1,128)}', space=vmem, size = 0x12000, scoped, tag = 'internal scratch']
  %s0 = inlined_call_operand.vmem [shape: f32[64,32], index: 0, kind: input, shape index: {}]
  %s1 = inlined_call_operand.vmem [shape: bf16[32,128], index: 1, kind: input, shape index: {}]
  %s2 = inlined_call_operand.vmem [shape: f32[1,128], index: 2, kind: input, shape index: {}]
  %s3 = inlined_call_operand.vmem [shape: bf16[128,128], index: 3, kind: input, shape index: {}]
  %s4 = inlined_call_operand.vmem [shape: f32[1,128], index: 4, kind: input, shape index: {}]
  %s5 = inlined_call_operand.vmem [shape: bf16[128,8], index: 5, kind: input, shape index: {}]
  %s6 = inlined_call_operand.vmem [shape: f32[1,8], index: 6, kind: input, shape index: {}]
  %s7 = inlined_call_operand.vmem [shape: f32[64,8], index: 7, kind: output, shape index: {}]
  %s8 = sld [smem:[#allocation0]]
  $region38: #{tpu_custom_call.1} parent=0
    _
  %s10 = ssub.s32 1, %s8
  %s11 = scalar_select 0, %s10, %s8
  // Predicated region
  $region2: #{tpu_custom_call.1} parent=0 // pred_check
    _
  $region3: #{tpu_custom_call.1} parent=0 // pred_check_branch
    %13 = sbr.rel (0) target = $region5
  $region4: #{tpu_custom_call.1} parent=0 // pred_region
    _
  $region5: #{tpu_custom_call.1} parent=0 // pred_fallthru
    _
  // Predicated region
  $region6: #{tpu_custom_call.1} parent=0 // pred_check
    _
  $region7: #{tpu_custom_call.1} parent=0 // pred_check_branch
    %15 = sbr.rel (0) target = $region9
  $region8: #{tpu_custom_call.1} parent=0 // pred_region
    _
  $region9: #{tpu_custom_call.1} parent=0 // pred_fallthru
    _
  // Predicated region
  $region10: #{tpu_custom_call.1} parent=0 // pred_check
    _
  $region11: #{tpu_custom_call.1} parent=0 // pred_check_branch
    %17 = sbr.rel (0) target = $region13
  $region12: #{tpu_custom_call.1} parent=0 // pred_region
    _
  $region13: #{tpu_custom_call.1} parent=0 // pred_fallthru
    _
  // Predicated region
  $region14: #{tpu_custom_call.1} parent=0 // pred_check
    _
  $region15: #{tpu_custom_call.1} parent=0 // pred_check_branch
    %19 = sbr.rel (0) target = $region17
  $region16: #{tpu_custom_call.1} parent=0 // pred_region
    _
  $region17: #{tpu_custom_call.1} parent=0 // pred_fallthru
    _
  // Predicated region
  $region18: #{tpu_custom_call.1} parent=0 // pred_check
    _
  $region19: #{tpu_custom_call.1} parent=0 // pred_check_branch
    %21 = sbr.rel (0) target = $region21
  $region20: #{tpu_custom_call.1} parent=0 // pred_region
    _
  $region21: #{tpu_custom_call.1} parent=0 // pred_fallthru
    _
  // Predicated region
  $region22: #{tpu_custom_call.1} parent=0 // pred_check
    _
  $region23: #{tpu_custom_call.1} parent=0 // pred_check_branch
    %23 = sbr.rel (0) target = $region25
  $region24: #{tpu_custom_call.1} parent=0 // pred_region
    _
  $region25: #{tpu_custom_call.1} parent=0 // pred_fallthru
    _
  // Predicated region
  $region26: #{tpu_custom_call.1} parent=0 // pred_check
    _
  $region27: #{tpu_custom_call.1} parent=0 // pred_check_branch
    %25 = sbr.rel (0) target = $region29
  $region28: #{tpu_custom_call.1} parent=0 // pred_region
    _
  $region29: #{tpu_custom_call.1} parent=0 // pred_fallthru
    _
  %v27 = vld [vmem:[%s0] sm:$0xff]
  %v28 = vld [vmem:[%s0 + $0x8] sm:$0xff]
  %v29 = vld [vmem:[%s0 + $0x10] sm:$0xff]
  %v30 = vld [vmem:[%s0 + $0x18] sm:$0xff]
  %v31 = vld [vmem:[%s0 + $0x20] sm:$0xff]
  %v32 = vld [vmem:[%s0 + $0x28] sm:$0xff]
  %v33 = vld [vmem:[%s0 + $0x30] sm:$0xff]
  %v34 = vld [vmem:[%s0 + $0x38] sm:$0xff]
  %v35 = vpack.c.bf16 %v28, %v27
  %v36 = vpack.c.bf16 %v30, %v29
  %v37 = vpack.c.bf16 %v32, %v31
  %v38 = vpack.c.bf16 %v34, %v33
  %v39 = vld [vmem:[%s1] sm:$0xf]
  %v40 = vld [vmem:[%s1 + $0x4] sm:$0xf]
  %v41 = vld [vmem:[%s1 + $0x8] sm:$0xf]
  %v42 = vld [vmem:[%s1 + $0xc] sm:$0xf]
  %v43 = vld [vmem:[%s2] sm:$0x1]
  %v45 = vlaneseq
  %v46 = vshrl.u32 %v45, 7
  %v47 = vsub.s32 0, %v46
  %v48 = vrot.slane %v43, %v47
  %v54 = vunpack.c.l.b16 %v39
  %v55 = vunpack.c.l.b16 %v40
  %v56 = vunpack.c.l.b16 %v41
  %v57 = vunpack.c.l.b16 %v42
  %v58 = vpack.c.b16 %v55, %v54
  %v59 = vpack.c.b16 %v57, %v56
  %vm62 = vcmask 261120
  %v64 = vsel %vm62, %v35, 0
  %v67 = vsel %vm62, %v36, 0
  %v70 = vsel %vm62, %v37, 0
  %v73 = vsel %vm62, %v38, 0
  %75 = vmatprep.subr.bf16.mxu0 0
  %76 = vmatpush1.bf16.msra.mxu0 0
  %77 = vmatprep.subr.bf16.mxu0 0
  %78 = vmatpush1.bf16.msra.mxu0 0
  %79 = vmatprep.subr.bf16.mxu0 0
  %80 = vmatpush1.bf16.msra.mxu0 0
  %81 = vmatprep.subr.bf16.mxu0 0
  %82 = vmatpush1.bf16.msra.mxu0 0
  %83 = vmatprep.subr.bf16.mxu0 0
  %84 = vmatpush1.bf16.msra.mxu0 0
  %85 = vmatprep.subr.bf16.mxu0 0
  %86 = vmatpush1.bf16.msra.mxu0 0
  %87 = vmatprep.subr.bf16.mxu0 0
  %88 = vmatpush1.bf16.msra.mxu0 %v59
  %89 = vmatprep.subr.bf16.mxu0 0
  %90 = vmatpush1.bf16.msra.mxu0 %v58
  %91 = vmatprep.subr.bf16.mxu0 0
  %92 = vmatpush2.bf16.msra.mxu0 0
  %93 = vmatprep.subr.bf16.mxu0 0
  %94 = vmatpush2.bf16.msra.mxu0 0
  %95 = vmatprep.subr.bf16.mxu0 0
  %96 = vmatpush2.bf16.msra.mxu0 0
  %97 = vmatprep.subr.bf16.mxu0 0
  %98 = vmatpush2.bf16.msra.mxu0 0
  %99 = vmatprep.subr.bf16.mxu0 0
  %100 = vmatpush2.bf16.msra.mxu0 0
  %101 = vmatprep.subr.bf16.mxu0 0
  %102 = vmatpush2.bf16.msra.mxu0 0
  %103 = vmatprep.subr.bf16.mxu0 0
  %104 = vmatpush2.bf16.msra.mxu0 0
  %105 = vmatprep.subr.bf16.mxu0 0
  %106 = vmatpush2.bf16.msra.mxu0 0
  %107 = vmatprep.mubr.bf16.mxu0 0
  %108 = vmatmul.mubr.bf16.gmra.mxu0 %v64
  %v109 = vpop.f32.mrf.mxu0
  %v110 = vadd.f32 %v48, %v109
  %v111 = vpop.f32.mrf.mxu0
  %v112 = vpop.f32.mrf.mxu0
  %v113 = vadd.f32 %v48, %v112
  %v114 = vpop.f32.mrf.mxu0
  %115 = vmatprep.mubr.bf16.mxu0 0
  %116 = vmatmul.mubr.bf16.gmra.mxu0 %v67
  %v117 = vpop.f32.mrf.mxu0
  %v118 = vadd.f32 %v48, %v117
  %v119 = vpop.f32.mrf.mxu0
  %v120 = vpop.f32.mrf.mxu0
  %v121 = vadd.f32 %v48, %v120
  %v122 = vpop.f32.mrf.mxu0
  %123 = vmatprep.mubr.bf16.mxu0 0
  %124 = vmatmul.mubr.bf16.gmra.mxu0 %v70
  %v125 = vpop.f32.mrf.mxu0
  %v126 = vadd.f32 %v48, %v125
  %v127 = vpop.f32.mrf.mxu0
  %v128 = vpop.f32.mrf.mxu0
  %v129 = vadd.f32 %v48, %v128
  %v130 = vpop.f32.mrf.mxu0
  %131 = vmatprep.mubr.bf16.mxu0 0
  %132 = vmatmul.mubr.bf16.gmra.mxu0 %v73
  %v133 = vpop.f32.mrf.mxu0
  %v134 = vadd.f32 %v48, %v133
  %v135 = vpop.f32.mrf.mxu0
  %v136 = vpop.f32.mrf.mxu0
  %v137 = vadd.f32 %v48, %v136
  %v138 = vpop.f32.mrf.mxu0
  %139 = vdwg.mxu0
  %v140 = vmul.f32 %v110, 0.01
  %v141 = vmul.f32 %v113, 0.01
  %v142 = vmul.f32 %v118, 0.01
  %v143 = vmul.f32 %v121, 0.01
  %v144 = vmul.f32 %v126, 0.01
  %v145 = vmul.f32 %v129, 0.01
  %v146 = vmul.f32 %v134, 0.01
  %v147 = vmul.f32 %v137, 0.01
  %v148 = vmax.f32 %v110, %v140
  %v149 = vmax.f32 %v113, %v141
  %v150 = vmax.f32 %v118, %v142
  %v151 = vmax.f32 %v121, %v143
  %v152 = vmax.f32 %v126, %v144
  %v153 = vmax.f32 %v129, %v145
  %v154 = vmax.f32 %v134, %v146
  %v155 = vmax.f32 %v137, %v147
  %v156 = vpack.c.bf16 %v149, %v148
  %v157 = vpack.c.bf16 %v151, %v150
  %v158 = vpack.c.bf16 %v153, %v152
  %v159 = vpack.c.bf16 %v155, %v154
  %v160 = vld [vmem:[%s3] sm:$0xf]
  %v161 = vld [vmem:[%s3 + $0x4] sm:$0xf]
  %v162 = vld [vmem:[%s3 + $0x8] sm:$0xf]
  %v163 = vld [vmem:[%s3 + $0xc] sm:$0xf]
  %v164 = vld [vmem:[%s3 + $0x10] sm:$0xf]
  %v165 = vld [vmem:[%s3 + $0x14] sm:$0xf]
  %v166 = vld [vmem:[%s3 + $0x18] sm:$0xf]
  %v167 = vld [vmem:[%s3 + $0x1c] sm:$0xf]
  %v168 = vld [vmem:[%s3 + $0x20] sm:$0xf]
  %v169 = vld [vmem:[%s3 + $0x24] sm:$0xf]
  %v170 = vld [vmem:[%s3 + $0x28] sm:$0xf]
  %v171 = vld [vmem:[%s3 + $0x2c] sm:$0xf]
  %v172 = vld [vmem:[%s3 + $0x30] sm:$0xf]
  %v173 = vld [vmem:[%s3 + $0x34] sm:$0xf]
  %v174 = vld [vmem:[%s3 + $0x38] sm:$0xf]
  %v175 = vld [vmem:[%s3 + $0x3c] sm:$0xf]
  %v176 = vld [vmem:[%s4] sm:$0x1]
  %v178 = vlaneseq
  %v179 = vshrl.u32 %v178, 7
  %v180 = vsub.s32 0, %v179
  %v181 = vrot.slane %v176, %v180
  %v199 = vunpack.c.l.b16 %v160
  %v200 = vunpack.c.l.b16 %v161
  %v201 = vunpack.c.l.b16 %v162
  %v202 = vunpack.c.l.b16 %v163
  %v203 = vunpack.c.l.b16 %v164
  %v204 = vunpack.c.l.b16 %v165
  %v205 = vunpack.c.l.b16 %v166
  %v206 = vunpack.c.l.b16 %v167
  %v207 = vunpack.c.l.b16 %v168
  %v208 = vunpack.c.l.b16 %v169
  %v209 = vunpack.c.l.b16 %v170
  %v210 = vunpack.c.l.b16 %v171
  %v211 = vunpack.c.l.b16 %v172
  %v212 = vunpack.c.l.b16 %v173
  %v213 = vunpack.c.l.b16 %v174
  %v214 = vunpack.c.l.b16 %v175
  %v215 = vpack.c.b16 %v200, %v199
  %v216 = vpack.c.b16 %v202, %v201
  %v217 = vpack.c.b16 %v204, %v203
  %v218 = vpack.c.b16 %v206, %v205
  %v219 = vpack.c.b16 %v208, %v207
  %v220 = vpack.c.b16 %v210, %v209
  %v221 = vpack.c.b16 %v212, %v211
  %v222 = vpack.c.b16 %v214, %v213
  %231 = vmatprep.subr.bf16.mxu0 0
  %232 = vmatpush1.bf16.msra.mxu0 %v222
  %233 = vmatprep.subr.bf16.mxu0 0
  %234 = vmatpush1.bf16.msra.mxu0 %v221
  %235 = vmatprep.subr.bf16.mxu0 0
  %236 = vmatpush1.bf16.msra.mxu0 %v220
  %237 = vmatprep.subr.bf16.mxu0 0
  %238 = vmatpush1.bf16.msra.mxu0 %v219
  %239 = vmatprep.subr.bf16.mxu0 0
  %240 = vmatpush1.bf16.msra.mxu0 %v218
  %241 = vmatprep.subr.bf16.mxu0 0
  %242 = vmatpush1.bf16.msra.mxu0 %v217
  %243 = vmatprep.subr.bf16.mxu0 0
  %244 = vmatpush1.bf16.msra.mxu0 %v216
  %245 = vmatprep.subr.bf16.mxu0 0
  %246 = vmatpush1.bf16.msra.mxu0 %v215
  %247 = vmatprep.subr.bf16.mxu0 0
  %248 = vmatpush2.bf16.msra.mxu0 0
  %249 = vmatprep.subr.bf16.mxu0 0
  %250 = vmatpush2.bf16.msra.mxu0 0
  %251 = vmatprep.subr.bf16.mxu0 0
  %252 = vmatpush2.bf16.msra.mxu0 0
  %253 = vmatprep.subr.bf16.mxu0 0
  %254 = vmatpush2.bf16.msra.mxu0 0
  %255 = vmatprep.subr.bf16.mxu0 0
  %256 = vmatpush2.bf16.msra.mxu0 0
  %257 = vmatprep.subr.bf16.mxu0 0
  %258 = vmatpush2.bf16.msra.mxu0 0
  %259 = vmatprep.subr.bf16.mxu0 0
  %260 = vmatpush2.bf16.msra.mxu0 0
  %261 = vmatprep.subr.bf16.mxu0 0
  %262 = vmatpush2.bf16.msra.mxu0 0
  %263 = vmatprep.mubr.bf16.mxu0 0
  %264 = vmatmul.mubr.bf16.gmra.mxu0 %v156
  %v265 = vpop.f32.mrf.mxu0
  %v266 = vadd.f32 %v181, %v265
  %v267 = vpop.f32.mrf.mxu0
  %v268 = vpop.f32.mrf.mxu0
  %v269 = vadd.f32 %v181, %v268
  %v270 = vpop.f32.mrf.mxu0
  %271 = vmatprep.mubr.bf16.mxu0 0
  %272 = vmatmul.mubr.bf16.gmra.mxu0 %v157
  %v273 = vpop.f32.mrf.mxu0
  %v274 = vadd.f32 %v181, %v273
  %v275 = vpop.f32.mrf.mxu0
  %v276 = vpop.f32.mrf.mxu0
  %v277 = vadd.f32 %v181, %v276
  %v278 = vpop.f32.mrf.mxu0
  %279 = vmatprep.mubr.bf16.mxu0 0
  %280 = vmatmul.mubr.bf16.gmra.mxu0 %v158
  %v281 = vpop.f32.mrf.mxu0
  %v282 = vadd.f32 %v181, %v281
  %v283 = vpop.f32.mrf.mxu0
  %v284 = vpop.f32.mrf.mxu0
  %v285 = vadd.f32 %v181, %v284
  %v286 = vpop.f32.mrf.mxu0
  %287 = vmatprep.mubr.bf16.mxu0 0
  %288 = vmatmul.mubr.bf16.gmra.mxu0 %v159
  %v289 = vpop.f32.mrf.mxu0
  %v290 = vadd.f32 %v181, %v289
  %v291 = vpop.f32.mrf.mxu0
  %v292 = vpop.f32.mrf.mxu0
  %v293 = vadd.f32 %v181, %v292
  %v294 = vpop.f32.mrf.mxu0
  %295 = vdwg.mxu0
  %v296 = vmul.f32 %v266, 0.01
  %v297 = vmul.f32 %v269, 0.01
  %v298 = vmul.f32 %v274, 0.01
  %v299 = vmul.f32 %v277, 0.01
  %v300 = vmul.f32 %v282, 0.01
  %v301 = vmul.f32 %v285, 0.01
  %v302 = vmul.f32 %v290, 0.01
  %v303 = vmul.f32 %v293, 0.01
  %v304 = vmax.f32 %v266, %v296
  %v305 = vmax.f32 %v269, %v297
  %v306 = vmax.f32 %v274, %v298
  %v307 = vmax.f32 %v277, %v299
  %v308 = vmax.f32 %v282, %v300
  %v309 = vmax.f32 %v285, %v301
  %v310 = vmax.f32 %v290, %v302
  %v311 = vmax.f32 %v293, %v303
  %v312 = vpack.c.bf16 %v305, %v304
  %v313 = vpack.c.bf16 %v307, %v306
  %v314 = vpack.c.bf16 %v309, %v308
  %v315 = vpack.c.bf16 %v311, %v310
  %v316 = vld [vmem:[%s5] sm:$0xf]
  %v317 = vld [vmem:[%s5 + $0x4] sm:$0xf]
  %v318 = vld [vmem:[%s5 + $0x8] sm:$0xf]
  %v319 = vld [vmem:[%s5 + $0xc] sm:$0xf]
  %v320 = vld [vmem:[%s5 + $0x10] sm:$0xf]
  %v321 = vld [vmem:[%s5 + $0x14] sm:$0xf]
  %v322 = vld [vmem:[%s5 + $0x18] sm:$0xf]
  %v323 = vld [vmem:[%s5 + $0x1c] sm:$0xf]
  %v324 = vld [vmem:[%s5 + $0x20] sm:$0xf]
  %v325 = vld [vmem:[%s5 + $0x24] sm:$0xf]
  %v326 = vld [vmem:[%s5 + $0x28] sm:$0xf]
  %v327 = vld [vmem:[%s5 + $0x2c] sm:$0xf]
  %v328 = vld [vmem:[%s5 + $0x30] sm:$0xf]
  %v329 = vld [vmem:[%s5 + $0x34] sm:$0xf]
  %v330 = vld [vmem:[%s5 + $0x38] sm:$0xf]
  %v331 = vld [vmem:[%s5 + $0x3c] sm:$0xf]
  %v332 = vld [vmem:[%s6] sm:$0x1]
  %v334 = vlaneseq
  %v335 = vshrl.u32 %v334, 7
  %v336 = vsub.s32 0, %v335
  %v337 = vrot.slane %v332, %v336
  %v355 = vunpack.c.l.b16 %v316
  %v356 = vunpack.c.l.b16 %v317
  %v357 = vunpack.c.l.b16 %v318
  %v358 = vunpack.c.l.b16 %v319
  %v359 = vunpack.c.l.b16 %v320
  %v360 = vunpack.c.l.b16 %v321
  %v361 = vunpack.c.l.b16 %v322
  %v362 = vunpack.c.l.b16 %v323
  %v363 = vunpack.c.l.b16 %v324
  %v364 = vunpack.c.l.b16 %v325
  %v365 = vunpack.c.l.b16 %v326
  %v366 = vunpack.c.l.b16 %v327
  %v367 = vunpack.c.l.b16 %v328
  %v368 = vunpack.c.l.b16 %v329
  %v369 = vunpack.c.l.b16 %v330
  %v370 = vunpack.c.l.b16 %v331
  %v371 = vpack.c.b16 %v356, %v355
  %v372 = vpack.c.b16 %v358, %v357
  %v373 = vpack.c.b16 %v360, %v359
  %v374 = vpack.c.b16 %v362, %v361
  %v375 = vpack.c.b16 %v364, %v363
  %v376 = vpack.c.b16 %v366, %v365
  %v377 = vpack.c.b16 %v368, %v367
  %v378 = vpack.c.b16 %v370, %v369
  %387 = vmatprep.subr.bf16.mxu0 0
  %388 = vmatpush1.bf16.msra.mxu0 %v378
  %389 = vmatprep.subr.bf16.mxu0 0
  %390 = vmatpush1.bf16.msra.mxu0 %v377
  %391 = vmatprep.subr.bf16.mxu0 0
  %392 = vmatpush1.bf16.msra.mxu0 %v376
  %393 = vmatprep.subr.bf16.mxu0 0
  %394 = vmatpush1.bf16.msra.mxu0 %v375
  %395 = vmatprep.subr.bf16.mxu0 0
  %396 = vmatpush1.bf16.msra.mxu0 %v374
  %397 = vmatprep.subr.bf16.mxu0 0
  %398 = vmatpush1.bf16.msra.mxu0 %v373
  %399 = vmatprep.subr.bf16.mxu0 0
  %400 = vmatpush1.bf16.msra.mxu0 %v372
  %401 = vmatprep.subr.bf16.mxu0 0
  %402 = vmatpush1.bf16.msra.mxu0 %v371
  %403 = vmatprep.subr.bf16.mxu0 0
  %404 = vmatpush2.bf16.msra.mxu0 0
  %405 = vmatprep.subr.bf16.mxu0 0
  %406 = vmatpush2.bf16.msra.mxu0 0
  %407 = vmatprep.subr.bf16.mxu0 0
  %408 = vmatpush2.bf16.msra.mxu0 0
  %409 = vmatprep.subr.bf16.mxu0 0
  %410 = vmatpush2.bf16.msra.mxu0 0
  %411 = vmatprep.subr.bf16.mxu0 0
  %412 = vmatpush2.bf16.msra.mxu0 0
  %413 = vmatprep.subr.bf16.mxu0 0
  %414 = vmatpush2.bf16.msra.mxu0 0
  %415 = vmatprep.subr.bf16.mxu0 0
  %416 = vmatpush2.bf16.msra.mxu0 0
  %417 = vmatprep.subr.bf16.mxu0 0
  %418 = vmatpush2.bf16.msra.mxu0 0
  %419 = vmatprep.mubr.bf16.mxu0 0
  %420 = vmatmul.mubr.bf16.gmra.mxu0 %v312
  %v421 = vpop.f32.mrf.mxu0
  %v422 = vadd.f32 %v337, %v421
  %v423 = vpop.f32.mrf.mxu0
  %v424 = vpop.f32.mrf.mxu0
  %v425 = vadd.f32 %v337, %v424
  %v426 = vpop.f32.mrf.mxu0
  %427 = vmatprep.mubr.bf16.mxu0 0
  %428 = vmatmul.mubr.bf16.gmra.mxu0 %v313
  %v429 = vpop.f32.mrf.mxu0
  %v430 = vadd.f32 %v337, %v429
  %v431 = vpop.f32.mrf.mxu0
  %v432 = vpop.f32.mrf.mxu0
  %v433 = vadd.f32 %v337, %v432
  %v434 = vpop.f32.mrf.mxu0
  %435 = vmatprep.mubr.bf16.mxu0 0
  %436 = vmatmul.mubr.bf16.gmra.mxu0 %v314
  %v437 = vpop.f32.mrf.mxu0
  %v438 = vadd.f32 %v337, %v437
  %v439 = vpop.f32.mrf.mxu0
  %v440 = vpop.f32.mrf.mxu0
  %v441 = vadd.f32 %v337, %v440
  %v442 = vpop.f32.mrf.mxu0
  %443 = vmatprep.mubr.bf16.mxu0 0
  %444 = vmatmul.mubr.bf16.gmra.mxu0 %v315
  %v445 = vpop.f32.mrf.mxu0
  %v446 = vadd.f32 %v337, %v445
  %v447 = vpop.f32.mrf.mxu0
  %v448 = vpop.f32.mrf.mxu0
  %v449 = vadd.f32 %v337, %v448
  %v450 = vpop.f32.mrf.mxu0
  %451 = vdwg.mxu0
  %vm452 = vcmask 64512
  %453 = vst.msk [vmem:[%s7] sm:$0xff] %vm452, %v422
  %454 = vst.msk [vmem:[%s7 + $0x8] sm:$0xff] %vm452, %v425
  %455 = vst.msk [vmem:[%s7 + $0x10] sm:$0xff] %vm452, %v430
  %456 = vst.msk [vmem:[%s7 + $0x18] sm:$0xff] %vm452, %v433
  %457 = vst.msk [vmem:[%s7 + $0x20] sm:$0xff] %vm452, %v438
  %458 = vst.msk [vmem:[%s7 + $0x28] sm:$0xff] %vm452, %v441
  %459 = vst.msk [vmem:[%s7 + $0x30] sm:$0xff] %vm452, %v446
  %460 = vst.msk [vmem:[%s7 + $0x38] sm:$0xff] %vm452, %v449
  // Predicated region
  $region30: #{tpu_custom_call.1} parent=0 // pred_check
    _
  $region31: #{tpu_custom_call.1} parent=0 // pred_check_branch
    %462 = sbr.rel (0) target = $region33
  $region32: #{tpu_custom_call.1} parent=0 // pred_region
    _
  $region33: #{tpu_custom_call.1} parent=0 // pred_fallthru
    _
  // Predicated region
  $region34: #{tpu_custom_call.1} parent=0 // pred_check
    _
  $region35: #{tpu_custom_call.1} parent=0 // pred_check_branch
    %464 = sbr.rel (0) target = $region37
  $region36: #{tpu_custom_call.1} parent=0 // pred_region
    _
  $region37: #{tpu_custom_call.1} parent=0 // pred_fallthru
    _

</llo_original>
